<compile_context>
chip_gen: v7x
topology: tpu7x:2x2x1
jax: 0.10.0
libtpu: 0.0.40
codegen_flags: <defaults>
</compile_context>

<pallas_src>
import jax
import jax.numpy as jnp
from jax.experimental import pallas as pl
from jax.experimental.pallas import tpu as pltpu


def _onehot_kernel(idx_ref, out_ref):
    # idx_ref: (TB, 1) int32; out_ref: (TB, TC) out dtype.
    j = pl.program_id(1)                  # class-tile index
    tile_c = out_ref.shape[1]
    # Shift the target class into this tile's local coordinates: one VALU add
    # on the narrow idx column instead of on every (TB, TC) output vreg.
    local_idx = idx_ref[...] - j * tile_c                              # (TB, 1)
    classes = jax.lax.broadcasted_iota(jnp.int32, out_ref.shape, 1)    # (TB, TC)
    out_ref[...] = (classes == local_idx).astype(out_ref.dtype)


def _min_sublane(dtype):
    # Minimum legal sublane tile: f32 -> 8, bf16 -> 16, int8/uint8 -> 32.
    return 8 * (4 // jnp.dtype(dtype).itemsize)


def _round_up(x, m):
    return -(-x // m) * m


def one_hot_encoder(x, n_classes, *, dtype=jnp.float32,
                    tile_b=512, tile_c=2048, whole_row_max=4096,
                    max_tile_bytes=8 << 20):
    """x: integer array of shape (B,). Returns (B, n_classes) `dtype` one-hot."""
    b = x.shape[0]
    idx = x.astype(jnp.int32).reshape(b, 1)

    itemsize = jnp.dtype(dtype).itemsize
    sub = _min_sublane(dtype)

    # ---- class-axis tile -------------------------------------------------
    # Prefer the whole class row as a single lane-dense slab when it fits:
    # fewer grid steps and one contiguous unmasked store per batch tile.
    tile_c = _round_up(max(tile_c, 128), 128)
    if n_classes <= max(tile_c, whole_row_max):
        tc = n_classes                       # full-dim block -> always legal
    else:
        tc = tile_c

    # ---- batch-axis tile ---------------------------------------------------
    # Cap the output tile at max_tile_bytes so the double-buffered footprint
    # (2 tiles) stays comfortable even on v7x's 64 MiB VMEM.
    tile_b = _round_up(max(tile_b, sub), sub)
    max_tb = max(sub, (max_tile_bytes // max(1, tc * itemsize)) // sub * sub)
    tb = min(tile_b, max_tb)
    tb = b if b < tb else tb                 # full-dim block if batch is small

    # v7x has 2 TensorCores: make sure the (parallel) grid has >= 2 steps when
    # the data allows, otherwise one core idles.
    if pl.cdiv(b, tb) == 1 and pl.cdiv(n_classes, tc) == 1 and b >= 2 * sub:
        tb = max(sub, _round_up(b // 2, sub))

    grid = (pl.cdiv(b, tb), pl.cdiv(n_classes, tc))

    # ---- VMEM budget -------------------------------------------------------
    # Double-buffered output tile + double-buffered (lane-padded) idx tile +
    # headroom, clamped against the physical VMEM of this generation.
    out_tile_bytes = tb * tc * itemsize
    idx_tile_bytes = _round_up(tb, 8) * 128 * 4     # (tb, 1) int32 pads to lanes
    try:
        vmem_cap = int(pltpu.get_tpu_info().vmem_capacity_bytes)
    except Exception:  # pragma: no cover - conservative fallback (v7x size)
        vmem_cap = 64 << 20
    vmem_bytes = 2 * out_tile_bytes + 2 * idx_tile_bytes + (2 << 20)
    vmem_bytes = int(min(vmem_bytes, (vmem_cap * 3) // 4))

    return pl.pallas_call(
        _onehot_kernel,
        out_shape=jax.ShapeDtypeStruct((b, n_classes), dtype),
        grid=grid,
        in_specs=[pl.BlockSpec((tb, 1), lambda i, j: (i, 0))],
        out_specs=pl.BlockSpec((tb, tc), lambda i, j: (i, j)),
        compiler_params=pltpu.CompilerParams(
            dimension_semantics=("parallel", "parallel"),
            vmem_limit_bytes=vmem_bytes,
        ),
    )(idx)


if __name__ == "__main__":
    key = jax.random.PRNGKey(0)

    # 1) Small case matching the module's toy usage (single batch tile).
    B, N_CLASSES = 8, 16
    x = jax.random.randint(key, (B,), minval=0, maxval=N_CLASSES, dtype=jnp.int32)
    out = jax.block_until_ready(one_hot_encoder(x, N_CLASSES))
    ref = jax.nn.one_hot(x, N_CLASSES, dtype=jnp.float32)
    assert out.shape == (B, N_CLASSES) and out.dtype == jnp.float32
    assert jnp.allclose(out, ref), "mismatch vs reference one-hot (small case)"

    # 2) Tiled case exercising the class-tile offset and masked edge tiles
    #    (B not a multiple of tile_b, explicit small tiles force a 2-D grid).
    B2, C2 = 40, 384
    x2 = jax.random.randint(jax.random.PRNGKey(0), (B2,), minval=0, maxval=C2,
                            dtype=jnp.int32)
    out2 = jax.block_until_ready(
        one_hot_encoder(x2, C2, tile_b=16, tile_c=128, whole_row_max=0))
    ref2 = jax.nn.one_hot(x2, C2, dtype=jnp.float32)
    assert out2.shape == (B2, C2)
    assert jnp.allclose(out2, ref2), "mismatch vs reference one-hot (tiled case)"

    # 3) Default-path case: whole class row as one lane-dense tile, unaligned
    #    B and C (masked edges), multiple batch tiles for TC sharding.
    B3, C3 = 1029, 777
    x3 = jax.random.randint(jax.random.PRNGKey(1), (B3,), minval=0, maxval=C3,
                            dtype=jnp.int32)
    out3 = jax.block_until_ready(one_hot_encoder(x3, C3))
    ref3 = jax.nn.one_hot(x3, C3, dtype=jnp.float32)
    assert out3.shape == (B3, C3)
    assert jnp.allclose(out3, ref3), "mismatch vs reference one-hot (default case)"

    # 4) Narrow-dtype output (halves HBM writeback; values are exactly 0/1).
    out4 = jax.block_until_ready(one_hot_encoder(x2, C2, dtype=jnp.bfloat16))
    ref4 = jax.nn.one_hot(x2, C2, dtype=jnp.bfloat16)
    assert out4.dtype == jnp.bfloat16
    assert jnp.allclose(out4.astype(jnp.float32), ref4.astype(jnp.float32)), \
        "mismatch vs reference one-hot (bf16 case)"

    print("KERNEL_OK")
</pallas_src>

<mosaic_0001>
module attributes {stable_mosaic.version = 11 : i64} {
  func.func @_onehot_kernel(%arg0: i32, %arg1: i32, %arg2: memref<8x1xi32, #tpu.memory_space<vmem>>, %arg3: memref<8x16xf32, #tpu.memory_space<vmem>>) attributes {dimension_semantics = [#tpu.dimension_semantics<parallel>, #tpu.dimension_semantics<parallel>], iteration_bounds = array<i64: 1, 1>, scalar_prefetch = 0 : i64, scratch_operands = 0 : i64, tpu.core_type = #tpu.core_type<tc>, window_params = [{transform_indices = @transform_0, window_bounds = array<i64: 8, 1>}, {transform_indices = @transform_1, window_bounds = array<i64: 8, 16>}]} {
    %c0 = arith.constant 0 : index
    %c0_0 = arith.constant 0 : index
    %0 = vector.load %arg2[%c0, %c0_0] : memref<8x1xi32, #tpu.memory_space<vmem>>, vector<8x1xi32>
    %c16_i32 = arith.constant 16 : i32
    %1 = arith.muli %arg1, %c16_i32 : i32
    %2 = vector.broadcast %1 : i32 to vector<8x1xi32>
    %3 = arith.subi %0, %2 : vector<8x1xi32>
    %4 = tpu.iota {dimensions = array<i32: 1>} : vector<8x16xi32>
    %5 = vector.broadcast %3 : vector<8x1xi32> to vector<8x16xi32>
    %6 = arith.cmpi eq, %4, %5 : vector<8x16xi32>
    %7 = arith.extui %6 : vector<8x16xi1> to vector<8x16xi32>
    %8 = arith.sitofp %7 : vector<8x16xi32> to vector<8x16xf32>
    %c0_1 = arith.constant 0 : index
    %c0_2 = arith.constant 0 : index
    %9 = vector.load %arg3[%c0_1, %c0_2] : memref<8x16xf32, #tpu.memory_space<vmem>>, vector<8x16xf32>
    tpu.vector_store %arg3[%c0_1, %c0_2], %8 {strides = array<i32>} : memref<8x16xf32, #tpu.memory_space<vmem>>, vector<8x16xf32>,
    return
  }
  func.func @transform_0(%arg0: i32, %arg1: i32) -> (i32, i32) {
    %c0_i32 = arith.constant 0 : i32
    %c0_i32_0 = arith.constant 0 : i32
    return %arg0, %c0_i32 : i32, i32
  }
  func.func @transform_1(%arg0: i32, %arg1: i32) -> (i32, i32) {
    %c0_i32 = arith.constant 0 : i32
    return %arg0, %arg1 : i32, i32
  }
}

</mosaic_0001>

<llo_original>
// kernel: tpu_custom_call.1
$region0: #{tpu_custom_call.1}
  #allocation0 [shape = 'u32[]', space=smem, size = 0x4, offset = 0x4, fixed_abs, tag = 'smem constant byte address 0x4 - core index']
  #allocation1 [shape = 'u32[144,128]{1,0:T(1,128)}', space=vmem, size = 0x12000, scoped, tag = 'internal scratch']
  %s0 = inlined_call_operand.vmem [shape: s32[8,1], index: 0, kind: input, shape index: {}]
  %s1 = inlined_call_operand.hbm [shape: f32[8,16], index: 1, kind: output, shape index: {}]
  %s2 = sld [smem:[#allocation0]]
  $region14: #{tpu_custom_call.1} parent=0
    _
  %s4 = ssub.s32 1, %s2
  %s5 = scalar_select 0, %s4, %s2
  $region1: #{tpu_custom_call.1} parent=0
    #allocation2 [shape = 'u8[4096]{0}', space=vmem, size = 0x1000, scoped, tag = 'output window, operand 0, single buffered']
    #allocation3 [shape = 's32[1]{0}', space=sflag, size = 0x4, scoped, tag = 'scoped memory for tpu_custom_call.1']
    %6 = vsyncpa [#allocation3], 0
    // Predicated region
    $region2: #{tpu_custom_call.1} parent=1 // pred_check
      _
    $region3: #{tpu_custom_call.1} parent=1 // pred_check_branch
      %8 = sbr.rel (0) target = $region5
    $region4: #{tpu_custom_call.1} parent=1 // pred_region
      _
    $region5: #{tpu_custom_call.1} parent=1 // pred_fallthru
      _
    %v9 = vld [vmem:[%s0] sm:$0xff]
    %s10 = smul.u32 0, 16
    %v11 = vstv %s10
    %v12 = vsub.s32 %v9, %v11
    %v13 = vlaneseq
    %v14 = vand.u32 %v13, 127
    %15 = vset.pattern.permute.xlu0 0
    %16 = vperm.xlu0 %15, %v12
    %v17 = vpop.permute.xlu0 %16
    %vm18 = vcmp.eq.s32.totalorder %v14, %v17
    %v19 = vsel %vm18, 1, 0
    %v20 = vcvt.s32.f32 %v19
    %vm21 = vcmask 130048
    %22 = vst.msk [vmem:[#allocation2] sm:$0xff] %vm21, %v20
    // Predicated region
    $region6: #{tpu_custom_call.1} parent=1 // pred_check
      _
    $region7: #{tpu_custom_call.1} parent=1 // pred_check_branch
      %24 = sbr.rel (0) target = $region9
    $region8: #{tpu_custom_call.1} parent=1 // pred_region
      %s26 = ssub.s32 128, 128
      %27 = vsyncadd [#allocation3], %s26
      %s29 = sshll.u32 [#allocation2], 4
      %s30 = int_to_ptr.vmem [resolvable:$true] %s29
      %32 = dma.vmem_to_hbm [thread:$0]  %s30, 128, %s1, [#allocation3]
    $region9: #{tpu_custom_call.1} parent=1 // pred_fallthru
      _
    // Predicated region
    $region10: #{tpu_custom_call.1} parent=1 // pred_check
      _
    $region11: #{tpu_custom_call.1} parent=1 // pred_check_branch
      %34 = sbr.rel (0) target = $region13
    $region12: #{tpu_custom_call.1} parent=1 // pred_region
      %35 = dma.done [#allocation3], 128
    $region13: #{tpu_custom_call.1} parent=1 // pred_fallthru
      _
    %36 = vsyncpa [#allocation3], 1

</llo_original>
